<compile_context>
chip_gen: v7x
topology: tpu7x:2x2x1
jax: 0.10.0
libtpu: 0.0.40
codegen_flags: <defaults>
</compile_context>

<pallas_src>
import jax
import jax.numpy as jnp
from jax.experimental import pallas as pl
from jax.experimental.pallas import tpu as pltpu

# Small, forward-consistent sizes
HIDDEN = 32        # hidden_size
VOCAB = 128        # output_size (vocab)
NUM_LAYERS = 2
BATCH = 8


def decoder_kernel(tok_ref, h0_ref, emb_ref, gru_ref, out_ref, logp_ref, h_ref):
    """One decode step per grid point. Weights and the carried hidden stay resident in VMEM."""
    H = HIDDEN
    t = pl.program_id(0)

    @pl.when(t == 0)
    def _():
        h_ref[...] = h0_ref[...]                      # initialize carried hidden state

    # Embedding lookup fused in-kernel: one-hot (B, V) @ (V, H) on the MXU.
    ids = tok_ref[0]                                  # (B, 1) int32
    onehot = (jax.lax.broadcasted_iota(jnp.int32, (ids.shape[0], VOCAB), 1)
              == ids).astype(jnp.float32)             # (B, V)
    x = jnp.dot(onehot, emb_ref[...], preferred_element_type=jnp.float32)   # (B, H)

    for layer in range(NUM_LAYERS):                   # static unrolled loop (L = 2)
        h = h_ref[layer]                              # (B, H)
        ih = gru_ref[2 * layer]                       # (H+1, 3H): rows 0..H-1 = W_ih^T, row H = b_ih
        hh = gru_ref[2 * layer + 1]                   # (H+1, 3H): rows 0..H-1 = W_hh^T, row H = b_hh
        gi = jnp.dot(x, ih[:H], preferred_element_type=jnp.float32) + ih[H:H + 1]
        gh = jnp.dot(h, hh[:H], preferred_element_type=jnp.float32) + hh[H:H + 1]
        r = jax.nn.sigmoid(gi[:, 0:H] + gh[:, 0:H])
        z = jax.nn.sigmoid(gi[:, H:2 * H] + gh[:, H:2 * H])
        n = jnp.tanh(gi[:, 2 * H:] + r * gh[:, 2 * H:])
        h_new = (1.0 - z) * n + z * h                 # PyTorch GRU cell update
        h_ref[layer] = h_new
        x = h_new                                     # feeds next layer (dropout = identity, eval)

    # Linear + LogSoftmax (EUP ops kept in f32 -- v5e has no bf16 EUP path).
    ow = out_ref[...]                                 # (H+1, V): rows 0..H-1 = W_out^T, row H = b_out
    logits = jnp.dot(x, ow[:H], preferred_element_type=jnp.float32) + ow[H:H + 1]
    m = jnp.max(logits, axis=1, keepdims=True)
    s = logits - m
    logp_ref[0] = s - jnp.log(jnp.sum(jnp.exp(s), axis=1, keepdims=True))


def _decode(tokens, hidden, params):
    """tokens: (T, B) int ids; hidden: (L, B, H) f32 -> (logp (T, B, V), new hidden (L, B, H))."""
    T, B = tokens.shape
    L, H, V = NUM_LAYERS, HIDDEN, VOCAB
    tok = tokens.astype(jnp.int32)[..., None]                        # (T, B, 1)

    logp, h_new = pl.pallas_call(
        decoder_kernel,
        grid=(T,),
        in_specs=[
            pl.BlockSpec((1, B, 1), lambda t: (t, 0, 0)),            # token ids, streamed per step
            pl.BlockSpec((L, B, H), lambda t: (0, 0, 0)),            # initial hidden (read at t==0)
            pl.BlockSpec((V, H), lambda t: (0, 0)),                  # embedding table, VMEM-resident
            pl.BlockSpec((2 * L, H + 1, 3 * H), lambda t: (0, 0, 0)),  # GRU weight+bias slab
            pl.BlockSpec((H + 1, V), lambda t: (0, 0)),              # out-proj weight+bias slab
        ],
        out_specs=(
            pl.BlockSpec((1, B, V), lambda t: (t, 0, 0)),            # per-step log-probs (V=128 lanes)
            pl.BlockSpec((L, B, H), lambda t: (0, 0, 0)),            # carried hidden (resident)
        ),
        out_shape=(jax.ShapeDtypeStruct((T, B, V), jnp.float32),
                   jax.ShapeDtypeStruct((L, B, H), jnp.float32)),
        input_output_aliases={1: 1},                                 # hidden-in aliases hidden-out
        compiler_params=pltpu.CompilerParams(
            dimension_semantics=("arbitrary",)),                     # steps are sequential (carry)
    )(tok, hidden, params["embedding"], params["gru"], params["out"])
    return logp, h_new


def decoder_forward(input_data, hidden, params):
    """Mirrors DecoderRNN.forward: input_data (1, B) -> (log-probs (B, V), hidden (L, B, H))."""
    logp, h_new = _decode(input_data, hidden, params)
    return logp[0], h_new


def decoder_forward_steps(tokens, hidden, params):
    """Fused T-step (teacher-forced) decode: one pallas_call, weights loaded into VMEM once."""
    return _decode(tokens, hidden, params)


def make_params(key):
    """Deterministic synthetic params packed into 3 arrays (shapes match nn.Embedding/GRU/Linear)."""
    ks = jax.random.split(key, 7)
    H, V, L = HIDDEN, VOCAB, NUM_LAYERS
    bound = 1.0 / (H ** 0.5)
    emb = jax.random.normal(ks[0], (V, H), jnp.float32)
    # PyTorch GRU stores weight_ih_l{k}: (3H, H), bias_*: (3H,). Pre-transpose for x @ W and pack
    # the bias as the last row:  slab[2l] = [W_ih^T ; b_ih],  slab[2l+1] = [W_hh^T ; b_hh].
    w_ih = jax.random.uniform(ks[1], (L, 3 * H, H), jnp.float32, -bound, bound)
    w_hh = jax.random.uniform(ks[2], (L, 3 * H, H), jnp.float32, -bound, bound)
    b_ih = jax.random.uniform(ks[3], (L, 3 * H), jnp.float32, -bound, bound)
    b_hh = jax.random.uniform(ks[4], (L, 3 * H), jnp.float32, -bound, bound)
    gru_ih = jnp.concatenate([jnp.transpose(w_ih, (0, 2, 1)), b_ih[:, None, :]], axis=1)  # (L,H+1,3H)
    gru_hh = jnp.concatenate([jnp.transpose(w_hh, (0, 2, 1)), b_hh[:, None, :]], axis=1)  # (L,H+1,3H)
    gru = jnp.stack([gru_ih, gru_hh], axis=1).reshape(2 * L, H + 1, 3 * H)
    # nn.Linear(H, V): weight (V, H), bias (V,) -> pack as [W^T ; b] = (H+1, V).
    w_out = jax.random.uniform(ks[5], (V, H), jnp.float32, -bound, bound)
    b_out = jax.random.uniform(ks[6], (V,), jnp.float32, -bound, bound)
    out = jnp.concatenate([w_out.T, b_out[None, :]], axis=0)
    return {"embedding": emb, "gru": gru, "out": out}


def decoder_forward_ref(input_data, hidden, params):
    """Pure-JAX reference of one PyTorch forward step (eval mode)."""
    H = HIDDEN
    x = jnp.take(params["embedding"], input_data[0], axis=0)
    h_new = []
    for l in range(NUM_LAYERS):
        ih, hh = params["gru"][2 * l], params["gru"][2 * l + 1]
        h = hidden[l]
        gi = x @ ih[:H] + ih[H]
        gh = h @ hh[:H] + hh[H]
        r = jax.nn.sigmoid(gi[:, :H] + gh[:, :H])
        z = jax.nn.sigmoid(gi[:, H:2 * H] + gh[:, H:2 * H])
        n = jnp.tanh(gi[:, 2 * H:] + r * gh[:, 2 * H:])
        hn = (1 - z) * n + z * h
        h_new.append(hn)
        x = hn
    logits = x @ params["out"][:H] + params["out"][H]
    return jax.nn.log_softmax(logits, axis=1), jnp.stack(h_new, axis=0)


def decoder_forward_steps_ref(tokens, hidden, params):
    logps, h = [], hidden
    for t in range(tokens.shape[0]):
        lp, h = decoder_forward_ref(tokens[t:t + 1], h, params)
        logps.append(lp)
    return jnp.stack(logps, axis=0), h


if __name__ == "__main__":
    key = jax.random.PRNGKey(0)
    k_param, k_tok, k_hid, k_seq = jax.random.split(key, 4)

    params = make_params(k_param)
    hidden = 0.1 * jax.random.normal(k_hid, (NUM_LAYERS, BATCH, HIDDEN), jnp.float32)

    # Inputs
    input_data = jax.random.randint(k_tok, (1, BATCH), 0, VOCAB, dtype=jnp.int32)   # (1, B)
    T = 8
    tokens = jax.random.randint(k_seq, (T, BATCH), 0, VOCAB, dtype=jnp.int32)       # (T, B)

    # References (computed first)
    logp_exp, h_exp = decoder_forward_ref(input_data, hidden, params)
    logp_seq_exp, h_seq_exp = decoder_forward_steps_ref(tokens, hidden, params)

    # --- single step: exactly the PyTorch module's forward ---
    logp, h_new = decoder_forward(input_data, hidden, params)
    logp = jax.block_until_ready(logp)
    h_new = jax.block_until_ready(h_new)
    assert logp.shape == (BATCH, VOCAB) and h_new.shape == (NUM_LAYERS, BATCH, HIDDEN)
    assert jnp.allclose(logp, logp_exp, atol=1e-5, rtol=1e-5), "log-softmax output mismatch"
    assert jnp.allclose(h_new, h_exp, atol=1e-5, rtol=1e-5), "hidden state mismatch"

    # --- fused multi-step decode: T teacher-forced steps in ONE pallas_call ---
    logp_seq, h_seq = decoder_forward_steps(tokens, hidden, params)
    logp_seq = jax.block_until_ready(logp_seq)
    h_seq = jax.block_until_ready(h_seq)
    assert logp_seq.shape == (T, BATCH, VOCAB)
    assert jnp.allclose(logp_seq, logp_seq_exp, atol=1e-4, rtol=1e-4), "multi-step logp mismatch"
    assert jnp.allclose(h_seq, h_seq_exp, atol=1e-4, rtol=1e-4), "multi-step hidden mismatch"

    print("KERNEL_OK")
</pallas_src>

<mosaic_0001>
module attributes {stable_mosaic.version = 11 : i64} {
  func.func @decoder_kernel(%arg0: i32, %arg1: memref<1x8x1xi32, #tpu.memory_space<vmem>>, %arg2: memref<2x8x32xf32, #tpu.memory_space<vmem>>, %arg3: memref<128x32xf32, #tpu.memory_space<vmem>>, %arg4: memref<4x33x96xf32, #tpu.memory_space<vmem>>, %arg5: memref<33x128xf32, #tpu.memory_space<vmem>>, %arg6: memref<1x8x128xf32, #tpu.memory_space<vmem>>, %arg7: memref<2x8x32xf32, #tpu.memory_space<vmem>>) attributes {dimension_semantics = [#tpu.dimension_semantics<arbitrary>], iteration_bounds = array<i64: 1>, scalar_prefetch = 0 : i64, scratch_operands = 0 : i64, tpu.core_type = #tpu.core_type<tc>, window_params = [{transform_indices = @transform_0, window_bounds = array<i64: 1, 8, 1>}, {pipeline_mode = #tpu.pipeline_mode<synchronous>, transform_indices = @transform_1, window_bounds = array<i64: 2, 8, 32>}, {pipeline_mode = #tpu.pipeline_mode<synchronous>, transform_indices = @transform_2, window_bounds = array<i64: 128, 32>}, {pipeline_mode = #tpu.pipeline_mode<synchronous>, transform_indices = @transform_3, window_bounds = array<i64: 4, 33, 96>}, {pipeline_mode = #tpu.pipeline_mode<synchronous>, transform_indices = @transform_4, window_bounds = array<i64: 33, 128>}, {transform_indices = @transform_5, window_bounds = array<i64: 1, 8, 128>}, {pipeline_mode = #tpu.pipeline_mode<synchronous>, transform_indices = @transform_6, window_bounds = array<i64: 2, 8, 32>}]} {
    %c0_i32 = arith.constant 0 : i32
    %0 = arith.cmpi eq, %arg0, %c0_i32 : i32
    %1 = arith.extui %0 : i1 to i32
    %c0_i32_0 = arith.constant 0 : i32
    %2 = arith.cmpi ne, %1, %c0_i32_0 : i32
    scf.if %2 {
      %c0_44 = arith.constant 0 : index
      %c0_45 = arith.constant 0 : index
      %c0_46 = arith.constant 0 : index
      %121 = vector.load %arg2[%c0_44, %c0_45, %c0_46] : memref<2x8x32xf32, #tpu.memory_space<vmem>>, vector<2x8x32xf32>
      %c0_47 = arith.constant 0 : index
      %c0_48 = arith.constant 0 : index
      %c0_49 = arith.constant 0 : index
      %122 = vector.load %arg7[%c0_47, %c0_48, %c0_49] : memref<2x8x32xf32, #tpu.memory_space<vmem>>, vector<2x8x32xf32>
      tpu.vector_store %arg7[%c0_47, %c0_48, %c0_49], %121 {strides = array<i32>} : memref<2x8x32xf32, #tpu.memory_space<vmem>>, vector<2x8x32xf32>,
    } else {
    }
    %c0 = arith.constant 0 : index
    %c0_1 = arith.constant 0 : index
    %c0_2 = arith.constant 0 : index
    %3 = vector.load %arg1[%c0, %c0_1, %c0_2] : memref<1x8x1xi32, #tpu.memory_space<vmem>>, vector<1x8x1xi32>
    %4 = vector.shape_cast %3 : vector<1x8x1xi32> to vector<8x1xi32>
    %5 = tpu.iota {dimensions = array<i32: 1>} : vector<8x128xi32>
    %6 = vector.broadcast %4 : vector<8x1xi32> to vector<8x128xi32>
    %7 = arith.cmpi eq, %5, %6 : vector<8x128xi32>
    %8 = arith.extui %7 : vector<8x128xi1> to vector<8x128xi32>
    %9 = arith.sitofp %8 : vector<8x128xi32> to vector<8x128xf32>
    %c0_3 = arith.constant 0 : index
    %c0_4 = arith.constant 0 : index
    %10 = vector.load %arg3[%c0_3, %c0_4] : memref<128x32xf32, #tpu.memory_space<vmem>>, vector<128x32xf32>
    %cst = arith.constant dense<0.000000e+00> : vector<8x32xf32>
    %11 = tpu.matmul %9, %10, %cst {dimension_numbers = #tpu.dot_dimension_numbers<[1], [0], [0], [1], [0, 0, 1, 1], [], []>} : vector<8x128xf32>, vector<128x32xf32>, vector<8x32xf32> -> vector<8x32xf32>
    %c0_5 = arith.constant 0 : index
    %c0_6 = arith.constant 0 : index
    %c0_7 = arith.constant 0 : index
    %12 = vector.load %arg7[%c0_5, %c0_6, %c0_7] : memref<2x8x32xf32, #tpu.memory_space<vmem>>, vector<1x8x32xf32>
    %13 = vector.shape_cast %12 : vector<1x8x32xf32> to vector<8x32xf32>
    %c0_8 = arith.constant 0 : index
    %c0_9 = arith.constant 0 : index
    %c0_10 = arith.constant 0 : index
    %14 = vector.load %arg4[%c0_8, %c0_9, %c0_10] : memref<4x33x96xf32, #tpu.memory_space<vmem>>, vector<1x33x96xf32>
    %15 = vector.shape_cast %14 : vector<1x33x96xf32> to vector<33x96xf32>
    %c1 = arith.constant 1 : index
    %c0_11 = arith.constant 0 : index
    %c0_12 = arith.constant 0 : index
    %16 = vector.load %arg4[%c1, %c0_11, %c0_12] : memref<4x33x96xf32, #tpu.memory_space<vmem>>, vector<1x33x96xf32>
    %17 = vector.shape_cast %16 : vector<1x33x96xf32> to vector<33x96xf32>
    %18 = vector.extract_strided_slice %15 {offsets = [0, 0], sizes = [32, 96], strides = [1, 1]} : vector<33x96xf32> to vector<32x96xf32>
    %cst_13 = arith.constant dense<0.000000e+00> : vector<8x96xf32>
    %19 = tpu.matmul %11, %18, %cst_13 {dimension_numbers = #tpu.dot_dimension_numbers<[1], [0], [0], [1], [0, 0, 1, 1], [], []>} : vector<8x32xf32>, vector<32x96xf32>, vector<8x96xf32> -> vector<8x96xf32>
    %20 = vector.extract_strided_slice %15 {offsets = [32, 0], sizes = [1, 96], strides = [1, 1]} : vector<33x96xf32> to vector<1x96xf32>
    %21 = vector.broadcast %20 : vector<1x96xf32> to vector<8x96xf32>
    %22 = arith.addf %19, %21 : vector<8x96xf32>
    %23 = vector.extract_strided_slice %17 {offsets = [0, 0], sizes = [32, 96], strides = [1, 1]} : vector<33x96xf32> to vector<32x96xf32>
    %cst_14 = arith.constant dense<0.000000e+00> : vector<8x96xf32>
    %24 = tpu.matmul %13, %23, %cst_14 {dimension_numbers = #tpu.dot_dimension_numbers<[1], [0], [0], [1], [0, 0, 1, 1], [], []>} : vector<8x32xf32>, vector<32x96xf32>, vector<8x96xf32> -> vector<8x96xf32>
    %25 = vector.extract_strided_slice %17 {offsets = [32, 0], sizes = [1, 96], strides = [1, 1]} : vector<33x96xf32> to vector<1x96xf32>
    %26 = vector.broadcast %25 : vector<1x96xf32> to vector<8x96xf32>
    %27 = arith.addf %24, %26 : vector<8x96xf32>
    %28 = vector.extract_strided_slice %22 {offsets = [0, 0], sizes = [8, 32], strides = [1, 1]} : vector<8x96xf32> to vector<8x32xf32>
    %29 = vector.extract_strided_slice %27 {offsets = [0, 0], sizes = [8, 32], strides = [1, 1]} : vector<8x96xf32> to vector<8x32xf32>
    %30 = arith.addf %28, %29 : vector<8x32xf32>
    %31 = arith.negf %30 : vector<8x32xf32>
    %32 = math.exp %31 : vector<8x32xf32>
    %cst_15 = arith.constant 1.000000e+00 : f32
    %33 = vector.broadcast %cst_15 : f32 to vector<8x32xf32>
    %34 = arith.addf %33, %32 : vector<8x32xf32>
    %35 = arith.divf %33, %34 : vector<8x32xf32>
    %36 = vector.extract_strided_slice %22 {offsets = [0, 32], sizes = [8, 32], strides = [1, 1]} : vector<8x96xf32> to vector<8x32xf32>
    %37 = vector.extract_strided_slice %27 {offsets = [0, 32], sizes = [8, 32], strides = [1, 1]} : vector<8x96xf32> to vector<8x32xf32>
    %38 = arith.addf %36, %37 : vector<8x32xf32>
    %39 = arith.negf %38 : vector<8x32xf32>
    %40 = math.exp %39 : vector<8x32xf32>
    %cst_16 = arith.constant 1.000000e+00 : f32
    %41 = vector.broadcast %cst_16 : f32 to vector<8x32xf32>
    %42 = arith.addf %41, %40 : vector<8x32xf32>
    %43 = arith.divf %41, %42 : vector<8x32xf32>
    %44 = vector.extract_strided_slice %22 {offsets = [0, 64], sizes = [8, 32], strides = [1, 1]} : vector<8x96xf32> to vector<8x32xf32>
    %45 = vector.extract_strided_slice %27 {offsets = [0, 64], sizes = [8, 32], strides = [1, 1]} : vector<8x96xf32> to vector<8x32xf32>
    %46 = arith.mulf %35, %45 : vector<8x32xf32>
    %47 = arith.addf %44, %46 : vector<8x32xf32>
    %48 = math.tanh %47 : vector<8x32xf32>
    %cst_17 = arith.constant 1.000000e+00 : f32
    %49 = vector.broadcast %cst_17 : f32 to vector<8x32xf32>
    %50 = arith.subf %49, %43 : vector<8x32xf32>
    %51 = arith.mulf %50, %48 : vector<8x32xf32>
    %52 = arith.mulf %43, %13 : vector<8x32xf32>
    %53 = arith.addf %51, %52 : vector<8x32xf32>
    %c0_18 = arith.constant 0 : index
    %c0_19 = arith.constant 0 : index
    %c0_20 = arith.constant 0 : index
    %54 = vector.load %arg7[%c0_18, %c0_19, %c0_20] : memref<2x8x32xf32, #tpu.memory_space<vmem>>, vector<1x8x32xf32>
    %55 = vector.shape_cast %54 : vector<1x8x32xf32> to vector<8x32xf32>
    %56 = vector.shape_cast %53 : vector<8x32xf32> to vector<1x8x32xf32>
    tpu.vector_store %arg7[%c0_18, %c0_19, %c0_20], %56 {strides = array<i32>} : memref<2x8x32xf32, #tpu.memory_space<vmem>>, vector<1x8x32xf32>,
    %c1_21 = arith.constant 1 : index
    %c0_22 = arith.constant 0 : index
    %c0_23 = arith.constant 0 : index
    %57 = vector.load %arg7[%c1_21, %c0_22, %c0_23] : memref<2x8x32xf32, #tpu.memory_space<vmem>>, vector<1x8x32xf32>
    %58 = vector.shape_cast %57 : vector<1x8x32xf32> to vector<8x32xf32>
    %c2 = arith.constant 2 : index
    %c0_24 = arith.constant 0 : index
    %c0_25 = arith.constant 0 : index
    %59 = vector.load %arg4[%c2, %c0_24, %c0_25] : memref<4x33x96xf32, #tpu.memory_space<vmem>>, vector<1x33x96xf32>
    %60 = vector.shape_cast %59 : vector<1x33x96xf32> to vector<33x96xf32>
    %c3 = arith.constant 3 : index
    %c0_26 = arith.constant 0 : index
    %c0_27 = arith.constant 0 : index
    %61 = vector.load %arg4[%c3, %c0_26, %c0_27] : memref<4x33x96xf32, #tpu.memory_space<vmem>>, vector<1x33x96xf32>
    %62 = vector.shape_cast %61 : vector<1x33x96xf32> to vector<33x96xf32>
    %63 = vector.extract_strided_slice %60 {offsets = [0, 0], sizes = [32, 96], strides = [1, 1]} : vector<33x96xf32> to vector<32x96xf32>
    %cst_28 = arith.constant dense<0.000000e+00> : vector<8x96xf32>
    %64 = tpu.matmul %53, %63, %cst_28 {dimension_numbers = #tpu.dot_dimension_numbers<[1], [0], [0], [1], [0, 0, 1, 1], [], []>} : vector<8x32xf32>, vector<32x96xf32>, vector<8x96xf32> -> vector<8x96xf32>
    %65 = vector.extract_strided_slice %60 {offsets = [32, 0], sizes = [1, 96], strides = [1, 1]} : vector<33x96xf32> to vector<1x96xf32>
    %66 = vector.broadcast %65 : vector<1x96xf32> to vector<8x96xf32>
    %67 = arith.addf %64, %66 : vector<8x96xf32>
    %68 = vector.extract_strided_slice %62 {offsets = [0, 0], sizes = [32, 96], strides = [1, 1]} : vector<33x96xf32> to vector<32x96xf32>
    %cst_29 = arith.constant dense<0.000000e+00> : vector<8x96xf32>
    %69 = tpu.matmul %58, %68, %cst_29 {dimension_numbers = #tpu.dot_dimension_numbers<[1], [0], [0], [1], [0, 0, 1, 1], [], []>} : vector<8x32xf32>, vector<32x96xf32>, vector<8x96xf32> -> vector<8x96xf32>
    %70 = vector.extract_strided_slice %62 {offsets = [32, 0], sizes = [1, 96], strides = [1, 1]} : vector<33x96xf32> to vector<1x96xf32>
    %71 = vector.broadcast %70 : vector<1x96xf32> to vector<8x96xf32>
    %72 = arith.addf %69, %71 : vector<8x96xf32>
    %73 = vector.extract_strided_slice %67 {offsets = [0, 0], sizes = [8, 32], strides = [1, 1]} : vector<8x96xf32> to vector<8x32xf32>
    %74 = vector.extract_strided_slice %72 {offsets = [0, 0], sizes = [8, 32], strides = [1, 1]} : vector<8x96xf32> to vector<8x32xf32>
    %75 = arith.addf %73, %74 : vector<8x32xf32>
    %76 = arith.negf %75 : vector<8x32xf32>
    %77 = math.exp %76 : vector<8x32xf32>
    %cst_30 = arith.constant 1.000000e+00 : f32
    %78 = vector.broadcast %cst_30 : f32 to vector<8x32xf32>
    %79 = arith.addf %78, %77 : vector<8x32xf32>
    %80 = arith.divf %78, %79 : vector<8x32xf32>
    %81 = vector.extract_strided_slice %67 {offsets = [0, 32], sizes = [8, 32], strides = [1, 1]} : vector<8x96xf32> to vector<8x32xf32>
    %82 = vector.extract_strided_slice %72 {offsets = [0, 32], sizes = [8, 32], strides = [1, 1]} : vector<8x96xf32> to vector<8x32xf32>
    %83 = arith.addf %81, %82 : vector<8x32xf32>
    %84 = arith.negf %83 : vector<8x32xf32>
    %85 = math.exp %84 : vector<8x32xf32>
    %cst_31 = arith.constant 1.000000e+00 : f32
    %86 = vector.broadcast %cst_31 : f32 to vector<8x32xf32>
    %87 = arith.addf %86, %85 : vector<8x32xf32>
    %88 = arith.divf %86, %87 : vector<8x32xf32>
    %89 = vector.extract_strided_slice %67 {offsets = [0, 64], sizes = [8, 32], strides = [1, 1]} : vector<8x96xf32> to vector<8x32xf32>
    %90 = vector.extract_strided_slice %72 {offsets = [0, 64], sizes = [8, 32], strides = [1, 1]} : vector<8x96xf32> to vector<8x32xf32>
    %91 = arith.mulf %80, %90 : vector<8x32xf32>
    %92 = arith.addf %89, %91 : vector<8x32xf32>
    %93 = math.tanh %92 : vector<8x32xf32>
    %cst_32 = arith.constant 1.000000e+00 : f32
    %94 = vector.broadcast %cst_32 : f32 to vector<8x32xf32>
    %95 = arith.subf %94, %88 : vector<8x32xf32>
    %96 = arith.mulf %95, %93 : vector<8x32xf32>
    %97 = arith.mulf %88, %58 : vector<8x32xf32>
    %98 = arith.addf %96, %97 : vector<8x32xf32>
    %c1_33 = arith.constant 1 : index
    %c0_34 = arith.constant 0 : index
    %c0_35 = arith.constant 0 : index
    %99 = vector.load %arg7[%c1_33, %c0_34, %c0_35] : memref<2x8x32xf32, #tpu.memory_space<vmem>>, vector<1x8x32xf32>
    %100 = vector.shape_cast %99 : vector<1x8x32xf32> to vector<8x32xf32>
    %101 = vector.shape_cast %98 : vector<8x32xf32> to vector<1x8x32xf32>
    tpu.vector_store %arg7[%c1_33, %c0_34, %c0_35], %101 {strides = array<i32>} : memref<2x8x32xf32, #tpu.memory_space<vmem>>, vector<1x8x32xf32>,
    %c0_36 = arith.constant 0 : index
    %c0_37 = arith.constant 0 : index
    %102 = vector.load %arg5[%c0_36, %c0_37] : memref<33x128xf32, #tpu.memory_space<vmem>>, vector<33x128xf32>
    %103 = vector.extract_strided_slice %102 {offsets = [0, 0], sizes = [32, 128], strides = [1, 1]} : vector<33x128xf32> to vector<32x128xf32>
    %cst_38 = arith.constant dense<0.000000e+00> : vector<8x128xf32>
    %104 = tpu.matmul %98, %103, %cst_38 {dimension_numbers = #tpu.dot_dimension_numbers<[1], [0], [0], [1], [0, 0, 1, 1], [], []>} : vector<8x32xf32>, vector<32x128xf32>, vector<8x128xf32> -> vector<8x128xf32>
    %105 = vector.extract_strided_slice %102 {offsets = [32, 0], sizes = [1, 128], strides = [1, 1]} : vector<33x128xf32> to vector<1x128xf32>
    %106 = vector.broadcast %105 : vector<1x128xf32> to vector<8x128xf32>
    %107 = arith.addf %104, %106 : vector<8x128xf32>
    %cst_39 = arith.constant dense<0xFF800000> : vector<8xf32>
    %108 = vector.multi_reduction <maximumf>, %107, %cst_39 [1] : vector<8x128xf32> to vector<8xf32>
    %109 = vector.shape_cast %108 : vector<8xf32> to vector<8x1xf32>
    %110 = vector.broadcast %109 : vector<8x1xf32> to vector<8x128xf32>
    %111 = arith.subf %107, %110 : vector<8x128xf32>
    %112 = math.exp %111 : vector<8x128xf32>
    %cst_40 = arith.constant dense<0.000000e+00> : vector<8xf32>
    %113 = vector.multi_reduction <add>, %112, %cst_40 [1] : vector<8x128xf32> to vector<8xf32>
    %114 = vector.shape_cast %113 : vector<8xf32> to vector<8x1xf32>
    %115 = math.log %114 : vector<8x1xf32>
    %116 = vector.broadcast %115 : vector<8x1xf32> to vector<8x128xf32>
    %117 = arith.subf %111, %116 : vector<8x128xf32>
    %c0_41 = arith.constant 0 : index
    %c0_42 = arith.constant 0 : index
    %c0_43 = arith.constant 0 : index
    %118 = vector.load %arg6[%c0_41, %c0_42, %c0_43] : memref<1x8x128xf32, #tpu.memory_space<vmem>>, vector<1x8x128xf32>
    %119 = vector.shape_cast %118 : vector<1x8x128xf32> to vector<8x128xf32>
    %120 = vector.shape_cast %117 : vector<8x128xf32> to vector<1x8x128xf32>
    tpu.vector_store %arg6[%c0_41, %c0_42, %c0_43], %120 {strides = array<i32>} : memref<1x8x128xf32, #tpu.memory_space<vmem>>, vector<1x8x128xf32>,
    return
  }
  func.func @transform_0(%arg0: i32) -> (i32, i32, i32) {
    %c0_i32 = arith.constant 0 : i32
    %c0_i32_0 = arith.constant 0 : i32
    %c0_i32_1 = arith.constant 0 : i32
    return %arg0, %c0_i32, %c0_i32_0 : i32, i32, i32
  }
  func.func @transform_1(%arg0: i32) -> (i32, i32, i32) {
    %c0_i32 = arith.constant 0 : i32
    %c0_i32_0 = arith.constant 0 : i32
    %c0_i32_1 = arith.constant 0 : i32
    %c0_i32_2 = arith.constant 0 : i32
    return %c0_i32, %c0_i32_0, %c0_i32_1 : i32, i32, i32
  }
  func.func @transform_2(%arg0: i32) -> (i32, i32) {
    %c0_i32 = arith.constant 0 : i32
    %c0_i32_0 = arith.constant 0 : i32
    %c0_i32_1 = arith.constant 0 : i32
    return %c0_i32, %c0_i32_0 : i32, i32
  }
  func.func @transform_3(%arg0: i32) -> (i32, i32, i32) {
    %c0_i32 = arith.constant 0 : i32
    %c0_i32_0 = arith.constant 0 : i32
    %c0_i32_1 = arith.constant 0 : i32
    %c0_i32_2 = arith.constant 0 : i32
    return %c0_i32, %c0_i32_0, %c0_i32_1 : i32, i32, i32
  }
  func.func @transform_4(%arg0: i32) -> (i32, i32) {
    %c0_i32 = arith.constant 0 : i32
    %c0_i32_0 = arith.constant 0 : i32
    %c0_i32_1 = arith.constant 0 : i32
    return %c0_i32, %c0_i32_0 : i32, i32
  }
  func.func @transform_5(%arg0: i32) -> (i32, i32, i32) {
    %c0_i32 = arith.constant 0 : i32
    %c0_i32_0 = arith.constant 0 : i32
    %c0_i32_1 = arith.constant 0 : i32
    return %arg0, %c0_i32, %c0_i32_0 : i32, i32, i32
  }
  func.func @transform_6(%arg0: i32) -> (i32, i32, i32) {
    %c0_i32 = arith.constant 0 : i32
    %c0_i32_0 = arith.constant 0 : i32
    %c0_i32_1 = arith.constant 0 : i32
    %c0_i32_2 = arith.constant 0 : i32
    return %c0_i32, %c0_i32_0, %c0_i32_1 : i32, i32, i32
  }
}

</mosaic_0001>

<llo_original>
// kernel: tpu_custom_call.1
$region0: #{tpu_custom_call.1}
  #allocation0 [shape = 'u32[]', space=smem, size = 0x4, offset = 0x4, fixed_abs, tag = 'smem constant byte address 0x4 - core index']
  #allocation1 [shape = 'u32[144,128]{1,0:T(1,128)}', space=vmem, size = 0x12000, scoped, tag = 'internal scratch']
  %s0 = inlined_call_operand.vmem [shape: s32[1,8,1], index: 0, kind: input, shape index: {}]
  %s1 = inlined_call_operand.hbm [shape: f32[2,8,32], index: 1, kind: input, shape index: {}, may-alias: {1,6}]
  %s2 = inlined_call_operand.vmem [shape: f32[128,32], index: 2, kind: input, shape index: {}]
  %s3 = inlined_call_operand.vmem [shape: f32[4,33,96], index: 3, kind: input, shape index: {}]
  %s4 = inlined_call_operand.vmem [shape: f32[33,128], index: 4, kind: input, shape index: {}]
  %s5 = inlined_call_operand.hbm [shape: f32[1,8,128], index: 5, kind: output, shape index: {0}]
  %s6 = inlined_call_operand.hbm [shape: f32[2,8,32], index: 6, kind: output, shape index: {1}, may-alias: {1,6}]
  %7 = xla_tuple %s5, %s6
  %s8 = sld [smem:[#allocation0]]
  $region46: #{tpu_custom_call.1} parent=0
    _
  %s10 = ssub.s32 1, %s8
  %s11 = scalar_select 0, %s10, %s8
  $region1: #{tpu_custom_call.1} parent=0
    #allocation2 [shape = 'u8[8192]{0}', space=vmem, size = 0x2000, scoped, tag = 'input window, operand 1, single buffered']
    #allocation3 [shape = 's32[1]{0}', space=sflag, size = 0x4, scoped, tag = 'scoped memory for tpu_custom_call.1']
    #allocation4 [shape = 's32[1]{0}', space=sflag, size = 0x4, scoped, tag = 'scoped memory for tpu_custom_call.1']
    #allocation5 [shape = 'u8[4096]{0}', space=vmem, size = 0x1000, scoped, tag = 'output window, operand 0, single buffered']
    #allocation6 [shape = 'u8[8192]{0}', space=vmem, size = 0x2000, scoped, tag = 'output window, operand 1, single buffered']
    #allocation7 [shape = 's32[1]{0}', space=sflag, size = 0x4, scoped, tag = 'scoped memory for tpu_custom_call.1']
    %12 = vsyncpa [#allocation3], 0
    %13 = vsyncpa [#allocation4], 0
    %14 = vsyncpa [#allocation7], 0
    // Predicated region
    $region2: #{tpu_custom_call.1} parent=1 // pred_check
      _
    $region3: #{tpu_custom_call.1} parent=1 // pred_check_branch
      %16 = sbr.rel (0) target = $region5
    $region4: #{tpu_custom_call.1} parent=1 // pred_region
      _
    $region5: #{tpu_custom_call.1} parent=1 // pred_fallthru
      _
    // Predicated region
    $region6: #{tpu_custom_call.1} parent=1 // pred_check
      _
    $region7: #{tpu_custom_call.1} parent=1 // pred_check_branch
      %18 = sbr.rel (0) target = $region9
    $region8: #{tpu_custom_call.1} parent=1 // pred_region
      %s20 = ssub.s32 256, 256
      %21 = vsyncadd [#allocation3], %s20
      %s22 = sshll.u32 [#allocation2], 4
      %s23 = int_to_ptr.vmem [resolvable:$true] %s22
      %28 = dma.hbm_to_vmem [thread:$0]  %s1, 256, %s23, [#allocation3], 128, 128, 8
    $region9: #{tpu_custom_call.1} parent=1 // pred_fallthru
      _
    // Predicated region
    $region10: #{tpu_custom_call.1} parent=1 // pred_check
      _
    $region11: #{tpu_custom_call.1} parent=1 // pred_check_branch
      %30 = sbr.rel (0) target = $region13
    $region12: #{tpu_custom_call.1} parent=1 // pred_region
      _
    $region13: #{tpu_custom_call.1} parent=1 // pred_fallthru
      _
    // Predicated region
    $region14: #{tpu_custom_call.1} parent=1 // pred_check
      _
    $region15: #{tpu_custom_call.1} parent=1 // pred_check_branch
      %32 = sbr.rel (0) target = $region17
    $region16: #{tpu_custom_call.1} parent=1 // pred_region
      _
    $region17: #{tpu_custom_call.1} parent=1 // pred_fallthru
      _
    // Predicated region
    $region18: #{tpu_custom_call.1} parent=1 // pred_check
      _
    $region19: #{tpu_custom_call.1} parent=1 // pred_check_branch
      %34 = sbr.rel (0) target = $region21
    $region20: #{tpu_custom_call.1} parent=1 // pred_region
      _
    $region21: #{tpu_custom_call.1} parent=1 // pred_fallthru
      _
    // Predicated region
    $region22: #{tpu_custom_call.1} parent=1 // pred_check
      _
    $region23: #{tpu_custom_call.1} parent=1 // pred_check_branch
      %36 = sbr.rel (0) target = $region25
    $region24: #{tpu_custom_call.1} parent=1 // pred_region
      %37 = dma.done [#allocation3], 256
    $region25: #{tpu_custom_call.1} parent=1 // pred_fallthru
      _
    %p38 = scmp.eq.s32.totalorder 0, 0
    // Predicated region
    $region26: #{tpu_custom_call.1} parent=1 // pred_check
      %p39 = pneg %p38
    $region27: #{tpu_custom_call.1} parent=1 // pred_check_branch
      %41 = sbr.rel (%p39) target = $region29
    $region28: #{tpu_custom_call.1} parent=1 // pred_region
      %v42 = vld [vmem:[#allocation2] sm:$0xff]
      %v43 = vld [vmem:[#allocation2 + $0x8] sm:$0xff]
      %vm44 = vcmask 261120
      %45 = vst.msk [vmem:[#allocation6] sm:$0xff] %vm44, %v42
      %46 = vst.msk [vmem:[#allocation6 + $0x8] sm:$0xff] %vm44, %v43
    $region29: #{tpu_custom_call.1} parent=1 // pred_fallthru
      _
    %v47 = vld [vmem:[%s0] sm:$0xff]
    %v48 = vlaneseq
    %v49 = vand.u32 %v48, 127
    %50 = vset.pattern.permute.xlu0 0
    %51 = vperm.xlu0 %50, %v47
    %v52 = vpop.permute.xlu0 %51
    %vm53 = vcmp.eq.s32.totalorder %v49, %v52
    %v54 = vsel %vm53, 1, 0
    %v55 = vcvt.s32.f32 %v54
    %v56 = vld [vmem:[%s2] sm:$0xff]
    %v57 = vld [vmem:[%s2 + $0x8] sm:$0xff]
    %v58 = vld [vmem:[%s2 + $0x10] sm:$0xff]
    %v59 = vld [vmem:[%s2 + $0x18] sm:$0xff]
    %v60 = vld [vmem:[%s2 + $0x20] sm:$0xff]
    %v61 = vld [vmem:[%s2 + $0x28] sm:$0xff]
    %v62 = vld [vmem:[%s2 + $0x30] sm:$0xff]
    %v63 = vld [vmem:[%s2 + $0x38] sm:$0xff]
    %v64 = vld [vmem:[%s2 + $0x40] sm:$0xff]
    %v65 = vld [vmem:[%s2 + $0x48] sm:$0xff]
    %v66 = vld [vmem:[%s2 + $0x50] sm:$0xff]
    %v67 = vld [vmem:[%s2 + $0x58] sm:$0xff]
    %v68 = vld [vmem:[%s2 + $0x60] sm:$0xff]
    %v69 = vld [vmem:[%s2 + $0x68] sm:$0xff]
    %v70 = vld [vmem:[%s2 + $0x70] sm:$0xff]
    %v71 = vld [vmem:[%s2 + $0x78] sm:$0xff]
    %72 = vmatprep.subr.mxu0 0.0
    %73 = vmatpush1.msra.mxu0 %v56
    %74 = vmatprep.subr.mxu0 0.0
    %75 = vmatpush1.msra.mxu0 %v57
    %76 = vmatprep.subr.mxu0 0.0
    %77 = vmatpush1.msra.mxu0 %v58
    %78 = vmatprep.subr.mxu0 0.0
    %79 = vmatpush1.msra.mxu0 %v59
    %80 = vmatprep.subr.mxu0 0.0
    %81 = vmatpush1.msra.mxu0 %v60
    %82 = vmatprep.subr.mxu0 0.0
    %83 = vmatpush1.msra.mxu0 %v61
    %84 = vmatprep.subr.mxu0 0.0
    %85 = vmatpush1.msra.mxu0 %v62
    %86 = vmatprep.subr.mxu0 0.0
    %87 = vmatpush1.msra.mxu0 %v63
    %88 = vmatprep.subr.mxu0 0.0
    %89 = vmatpush1.msra.mxu0 %v64
    %90 = vmatprep.subr.mxu0 0.0
    %91 = vmatpush1.msra.mxu0 %v65
    %92 = vmatprep.subr.mxu0 0.0
    %93 = vmatpush1.msra.mxu0 %v66
    %94 = vmatprep.subr.mxu0 0.0
    %95 = vmatpush1.msra.mxu0 %v67
    %96 = vmatprep.subr.mxu0 0.0
    %97 = vmatpush1.msra.mxu0 %v68
    %98 = vmatprep.subr.mxu0 0.0
    %99 = vmatpush1.msra.mxu0 %v69
    %100 = vmatprep.subr.mxu0 0.0
    %101 = vmatpush1.msra.mxu0 %v70
    %102 = vmatprep.subr.mxu0 0.0
    %103 = vmatpush1.msra.mxu0 %v71
    %104 = vmatprep.subr.mxu0 0.0
    %105 = vmatpush1.msra.mxu0 0.0
    %106 = vmatprep.subr.mxu0 0.0
    %107 = vmatpush1.msra.mxu0 0.0
    %108 = vmatprep.subr.mxu0 0.0
    %109 = vmatpush1.msra.mxu0 0.0
    %110 = vmatprep.subr.mxu0 0.0
    %111 = vmatpush1.msra.mxu0 0.0
    %112 = vmatprep.subr.mxu0 0.0
    %113 = vmatpush1.msra.mxu0 0.0
    %114 = vmatprep.subr.mxu0 0.0
    %115 = vmatpush1.msra.mxu0 0.0
    %116 = vmatprep.subr.mxu0 0.0
    %117 = vmatpush1.msra.mxu0 0.0
    %118 = vmatprep.subr.mxu0 0.0
    %119 = vmatpush1.msra.mxu0 0.0
    %120 = vmatprep.subr.mxu0 0.0
    %121 = vmatpush1.msra.mxu0 0.0
    %122 = vmatprep.subr.mxu0 0.0
    %123 = vmatpush1.msra.mxu0 0.0
    %124 = vmatprep.subr.mxu0 0.0
    %125 = vmatpush1.msra.mxu0 0.0
    %126 = vmatprep.subr.mxu0 0.0
    %127 = vmatpush1.msra.mxu0 0.0
    %128 = vmatprep.subr.mxu0 0.0
    %129 = vmatpush1.msra.mxu0 0.0
    %130 = vmatprep.subr.mxu0 0.0
    %131 = vmatpush1.msra.mxu0 0.0
    %132 = vmatprep.subr.mxu0 0.0
    %133 = vmatpush1.msra.mxu0 0.0
    %134 = vmatprep.subr.mxu0 0.0
    %135 = vmatpush1.msra.mxu0 0.0
    %136 = vmatprep.mubr.f32.mxu0 0.0
    %137 = vmatmul.mubr.f32.gmra.mrb[0].mxu0 %v55
    %v138 = vpop.f32.mrb[0].mxu0
    %v139 = vadd.f32 0.0, %v138
    %v140 = vpop.f32.mrb[0].mxu0
    %141 = vdwg.mxu0
    %v142 = vld [vmem:[#allocation6] sm:$0xff]
    %v143 = vld [vmem:[%s3] sm:$0xff]
    %v144 = vld [vmem:[%s3 + $0x8] sm:$0xff]
    %v145 = vld [vmem:[%s3 + $0x10] sm:$0xff]
    %v146 = vld [vmem:[%s3 + $0x18] sm:$0xff]
    %v147 = vld [vmem:[%s3 + $0x20] sm:$0x1]
    %s148 = scalar_lea.vmem %s3, 40
    %v149 = vld [vmem:[%s148] sm:$0xff]
    %v150 = vld [vmem:[%s148 + $0x8] sm:$0xff]
    %v151 = vld [vmem:[%s148 + $0x10] sm:$0xff]
    %v152 = vld [vmem:[%s148 + $0x18] sm:$0xff]
    %v153 = vld [vmem:[%s148 + $0x20] sm:$0x1]
    %v154 = vlaneseq
    %v155 = vshrl.u32 %v154, 7
    %v156 = vsub.s32 0, %v155
    %v157 = vrot.slane %v147, %v156
    %vm158 = vcmask 261120
    %v160 = vsel %vm158, %v139, 0
    %162 = vmatprep.subr.mxu0 0.0
    %163 = vmatpush1.msra.mxu0 %v143
    %164 = vmatprep.subr.mxu0 0.0
    %165 = vmatpush1.msra.mxu0 %v144
    %166 = vmatprep.subr.mxu0 0.0
    %167 = vmatpush1.msra.mxu0 %v145
    %168 = vmatprep.subr.mxu0 0.0
    %169 = vmatpush1.msra.mxu0 %v146
    %170 = vmatprep.subr.mxu0 0.0
    %171 = vmatpush1.msra.mxu0 0.0
    %172 = vmatprep.subr.mxu0 0.0
    %173 = vmatpush1.msra.mxu0 0.0
    %174 = vmatprep.subr.mxu0 0.0
    %175 = vmatpush1.msra.mxu0 0.0
    %176 = vmatprep.subr.mxu0 0.0
    %177 = vmatpush1.msra.mxu0 0.0
    %178 = vmatprep.subr.mxu0 0.0
    %179 = vmatpush1.msra.mxu0 0.0
    %180 = vmatprep.subr.mxu0 0.0
    %181 = vmatpush1.msra.mxu0 0.0
    %182 = vmatprep.subr.mxu0 0.0
    %183 = vmatpush1.msra.mxu0 0.0
    %184 = vmatprep.subr.mxu0 0.0
    %185 = vmatpush1.msra.mxu0 0.0
    %186 = vmatprep.subr.mxu0 0.0
    %187 = vmatpush1.msra.mxu0 0.0
    %188 = vmatprep.subr.mxu0 0.0
    %189 = vmatpush1.msra.mxu0 0.0
    %190 = vmatprep.subr.mxu0 0.0
    %191 = vmatpush1.msra.mxu0 0.0
    %192 = vmatprep.subr.mxu0 0.0
    %193 = vmatpush1.msra.mxu0 0.0
    %194 = vmatprep.subr.mxu0 0.0
    %195 = vmatpush1.msra.mxu0 0.0
    %196 = vmatprep.subr.mxu0 0.0
    %197 = vmatpush1.msra.mxu0 0.0
    %198 = vmatprep.subr.mxu0 0.0
    %199 = vmatpush1.msra.mxu0 0.0
    %200 = vmatprep.subr.mxu0 0.0
    %201 = vmatpush1.msra.mxu0 0.0
    %202 = vmatprep.subr.mxu0 0.0
    %203 = vmatpush1.msra.mxu0 0.0
    %204 = vmatprep.subr.mxu0 0.0
    %205 = vmatpush1.msra.mxu0 0.0
    %206 = vmatprep.subr.mxu0 0.0
    %207 = vmatpush1.msra.mxu0 0.0
    %208 = vmatprep.subr.mxu0 0.0
    %209 = vmatpush1.msra.mxu0 0.0
    %210 = vmatprep.subr.mxu0 0.0
    %211 = vmatpush1.msra.mxu0 0.0
    %212 = vmatprep.subr.mxu0 0.0
    %213 = vmatpush1.msra.mxu0 0.0
    %214 = vmatprep.subr.mxu0 0.0
    %215 = vmatpush1.msra.mxu0 0.0
    %216 = vmatprep.subr.mxu0 0.0
    %217 = vmatpush1.msra.mxu0 0.0
    %218 = vmatprep.subr.mxu0 0.0
    %219 = vmatpush1.msra.mxu0 0.0
    %220 = vmatprep.subr.mxu0 0.0
    %221 = vmatpush1.msra.mxu0 0.0
    %222 = vmatprep.subr.mxu0 0.0
    %223 = vmatpush1.msra.mxu0 0.0
    %224 = vmatprep.subr.mxu0 0.0
    %225 = vmatpush1.msra.mxu0 0.0
    %226 = vmatprep.mubr.f32.mxu0 0.0
    %227 = vmatmul.mubr.f32.gmra.mrb[0].mxu0 %v160
    %v228 = vpop.f32.mrb[0].mxu0
    %v229 = vadd.f32 %v157, %v228
    %v230 = vpop.f32.mrb[0].mxu0
    %231 = vdwg.mxu0
    %v232 = vlaneseq
    %v233 = vshrl.u32 %v232, 7
    %v234 = vsub.s32 0, %v233
    %v235 = vrot.slane %v153, %v234
    %v237 = vsel %vm158, %v142, 0
    %239 = vmatprep.subr.mxu0 0.0
    %240 = vmatpush1.msra.mxu0 %v149
    %241 = vmatprep.subr.mxu0 0.0
    %242 = vmatpush1.msra.mxu0 %v150
    %243 = vmatprep.subr.mxu0 0.0
    %244 = vmatpush1.msra.mxu0 %v151
    %245 = vmatprep.subr.mxu0 0.0
    %246 = vmatpush1.msra.mxu0 %v152
    %247 = vmatprep.subr.mxu0 0.0
    %248 = vmatpush1.msra.mxu0 0.0
    %249 = vmatprep.subr.mxu0 0.0
    %250 = vmatpush1.msra.mxu0 0.0
    %251 = vmatprep.subr.mxu0 0.0
    %252 = vmatpush1.msra.mxu0 0.0
    %253 = vmatprep.subr.mxu0 0.0
    %254 = vmatpush1.msra.mxu0 0.0
    %255 = vmatprep.subr.mxu0 0.0
    %256 = vmatpush1.msra.mxu0 0.0
    %257 = vmatprep.subr.mxu0 0.0
    %258 = vmatpush1.msra.mxu0 0.0
    %259 = vmatprep.subr.mxu0 0.0
    %260 = vmatpush1.msra.mxu0 0.0
    %261 = vmatprep.subr.mxu0 0.0
    %262 = vmatpush1.msra.mxu0 0.0
    %263 = vmatprep.subr.mxu0 0.0
    %264 = vmatpush1.msra.mxu0 0.0
    %265 = vmatprep.subr.mxu0 0.0
    %266 = vmatpush1.msra.mxu0 0.0
    %267 = vmatprep.subr.mxu0 0.0
    %268 = vmatpush1.msra.mxu0 0.0
    %269 = vmatprep.subr.mxu0 0.0
    %270 = vmatpush1.msra.mxu0 0.0
    %271 = vmatprep.subr.mxu0 0.0
    %272 = vmatpush1.msra.mxu0 0.0
    %273 = vmatprep.subr.mxu0 0.0
    %274 = vmatpush1.msra.mxu0 0.0
    %275 = vmatprep.subr.mxu0 0.0
    %276 = vmatpush1.msra.mxu0 0.0
    %277 = vmatprep.subr.mxu0 0.0
    %278 = vmatpush1.msra.mxu0 0.0
    %279 = vmatprep.subr.mxu0 0.0
    %280 = vmatpush1.msra.mxu0 0.0
    %281 = vmatprep.subr.mxu0 0.0
    %282 = vmatpush1.msra.mxu0 0.0
    %283 = vmatprep.subr.mxu0 0.0
    %284 = vmatpush1.msra.mxu0 0.0
    %285 = vmatprep.subr.mxu0 0.0
    %286 = vmatpush1.msra.mxu0 0.0
    %287 = vmatprep.subr.mxu0 0.0
    %288 = vmatpush1.msra.mxu0 0.0
    %289 = vmatprep.subr.mxu0 0.0
    %290 = vmatpush1.msra.mxu0 0.0
    %291 = vmatprep.subr.mxu0 0.0
    %292 = vmatpush1.msra.mxu0 0.0
    %293 = vmatprep.subr.mxu0 0.0
    %294 = vmatpush1.msra.mxu0 0.0
    %295 = vmatprep.subr.mxu0 0.0
    %296 = vmatpush1.msra.mxu0 0.0
    %297 = vmatprep.subr.mxu0 0.0
    %298 = vmatpush1.msra.mxu0 0.0
    %299 = vmatprep.subr.mxu0 0.0
    %300 = vmatpush1.msra.mxu0 0.0
    %301 = vmatprep.subr.mxu0 0.0
    %302 = vmatpush1.msra.mxu0 0.0
    %303 = vmatprep.mubr.f32.mxu0 0.0
    %304 = vmatmul.mubr.f32.gmra.mrb[0].mxu0 %v237
    %v305 = vpop.f32.mrb[0].mxu0
    %v306 = vadd.f32 %v235, %v305
    %v307 = vpop.f32.mrb[0].mxu0
    %308 = vdwg.mxu0
    %v309 = vadd.f32 %v229, %v306
    %v310 = vxor.u32 %v309, 2147483648
    %v311 = vmul.f32 %v310, 1.442695
    %v312 = vpow.pop %v311
    %v313 = vadd.f32 %v312, 1.0
    %v314 = vrcp.pop %v313
    %v315 = vmul.f32 1.0, %v314
    %317 = vrot.lane.b32.xlu0 %v306, 64
    %v318 = vpop.permute.xlu0 %317
    %v320 = vmul.f32 %v315, %v318
    %322 = vrot.lane.b32.xlu0 %v320, 64
    %v323 = vpop.permute.xlu0 %322
    %v325 = vadd.f32 %v229, %v323
    %v326 = vtanh.pop %v325
    %v327 = vsub.f32 1.0, %v315
    %329 = vrot.lane.b32.xlu0 %v326, 96
    %v330 = vpop.permute.xlu0 %329
    %v332 = vmul.f32 %v327, %v330
    %333 = vrot.lane.b32.xlu0 %v142, 32
    %v334 = vpop.permute.xlu0 %333
    %v336 = vmul.f32 %v315, %v334
    %v337 = vadd.f32 %v332, %v336
    %339 = vrot.lane.b32.xlu0 %v337, 96
    %v340 = vpop.permute.xlu0 %339
    %342 = vst.msk [vmem:[#allocation6] sm:$0xff] %vm158, %v340
    %s343 = scalar_lea.vmem [#allocation6], 8
    %v344 = vld [vmem:[%s343] sm:$0xff]
    %s345 = scalar_lea.vmem %s3, 80
    %v346 = vld [vmem:[%s345] sm:$0xff]
    %v347 = vld [vmem:[%s345 + $0x8] sm:$0xff]
    %v348 = vld [vmem:[%s345 + $0x10] sm:$0xff]
    %v349 = vld [vmem:[%s345 + $0x18] sm:$0xff]
    %v350 = vld [vmem:[%s345 + $0x20] sm:$0x1]
    %s351 = scalar_lea.vmem %s3, 120
    %v352 = vld [vmem:[%s351] sm:$0xff]
    %v353 = vld [vmem:[%s351 + $0x8] sm:$0xff]
    %v354 = vld [vmem:[%s351 + $0x10] sm:$0xff]
    %v355 = vld [vmem:[%s351 + $0x18] sm:$0xff]
    %v356 = vld [vmem:[%s351 + $0x20] sm:$0x1]
    %v357 = vlaneseq
    %v358 = vshrl.u32 %v357, 7
    %v359 = vsub.s32 0, %v358
    %v360 = vrot.slane %v350, %v359
    %v361 = vsel %vm158, %v340, 0
    %363 = vmatprep.subr.mxu0 0.0
    %364 = vmatpush1.msra.mxu0 %v346
    %365 = vmatprep.subr.mxu0 0.0
    %366 = vmatpush1.msra.mxu0 %v347
    %367 = vmatprep.subr.mxu0 0.0
    %368 = vmatpush1.msra.mxu0 %v348
    %369 = vmatprep.subr.mxu0 0.0
    %370 = vmatpush1.msra.mxu0 %v349
    %371 = vmatprep.subr.mxu0 0.0
    %372 = vmatpush1.msra.mxu0 0.0
    %373 = vmatprep.subr.mxu0 0.0
    %374 = vmatpush1.msra.mxu0 0.0
    %375 = vmatprep.subr.mxu0 0.0
    %376 = vmatpush1.msra.mxu0 0.0
    %377 = vmatprep.subr.mxu0 0.0
    %378 = vmatpush1.msra.mxu0 0.0
    %379 = vmatprep.subr.mxu0 0.0
    %380 = vmatpush1.msra.mxu0 0.0
    %381 = vmatprep.subr.mxu0 0.0
    %382 = vmatpush1.msra.mxu0 0.0
    %383 = vmatprep.subr.mxu0 0.0
    %384 = vmatpush1.msra.mxu0 0.0
    %385 = vmatprep.subr.mxu0 0.0
    %386 = vmatpush1.msra.mxu0 0.0
    %387 = vmatprep.subr.mxu0 0.0
    %388 = vmatpush1.msra.mxu0 0.0
    %389 = vmatprep.subr.mxu0 0.0
    %390 = vmatpush1.msra.mxu0 0.0
    %391 = vmatprep.subr.mxu0 0.0
    %392 = vmatpush1.msra.mxu0 0.0
    %393 = vmatprep.subr.mxu0 0.0
    %394 = vmatpush1.msra.mxu0 0.0
    %395 = vmatprep.subr.mxu0 0.0
    %396 = vmatpush1.msra.mxu0 0.0
    %397 = vmatprep.subr.mxu0 0.0
    %398 = vmatpush1.msra.mxu0 0.0
    %399 = vmatprep.subr.mxu0 0.0
    %400 = vmatpush1.msra.mxu0 0.0
    %401 = vmatprep.subr.mxu0 0.0
    %402 = vmatpush1.msra.mxu0 0.0
    %403 = vmatprep.subr.mxu0 0.0
    %404 = vmatpush1.msra.mxu0 0.0
    %405 = vmatprep.subr.mxu0 0.0
    %406 = vmatpush1.msra.mxu0 0.0
    %407 = vmatprep.subr.mxu0 0.0
    %408 = vmatpush1.msra.mxu0 0.0
    %409 = vmatprep.subr.mxu0 0.0
    %410 = vmatpush1.msra.mxu0 0.0
    %411 = vmatprep.subr.mxu0 0.0
    %412 = vmatpush1.msra.mxu0 0.0
    %413 = vmatprep.subr.mxu0 0.0
    %414 = vmatpush1.msra.mxu0 0.0
    %415 = vmatprep.subr.mxu0 0.0
    %416 = vmatpush1.msra.mxu0 0.0
    %417 = vmatprep.subr.mxu0 0.0
    %418 = vmatpush1.msra.mxu0 0.0
    %419 = vmatprep.subr.mxu0 0.0
    %420 = vmatpush1.msra.mxu0 0.0
    %421 = vmatprep.subr.mxu0 0.0
    %422 = vmatpush1.msra.mxu0 0.0
    %423 = vmatprep.subr.mxu0 0.0
    %424 = vmatpush1.msra.mxu0 0.0
    %425 = vmatprep.subr.mxu0 0.0
    %426 = vmatpush1.msra.mxu0 0.0
    %427 = vmatprep.mubr.f32.mxu0 0.0
    %428 = vmatmul.mubr.f32.gmra.mrb[0].mxu0 %v361
    %v429 = vpop.f32.mrb[0].mxu0
    %v430 = vadd.f32 %v360, %v429
    %v431 = vpop.f32.mrb[0].mxu0
    %432 = vdwg.mxu0
    %v433 = vlaneseq
    %v434 = vshrl.u32 %v433, 7
    %v435 = vsub.s32 0, %v434
    %v436 = vrot.slane %v356, %v435
    %v438 = vsel %vm158, %v344, 0
    %440 = vmatprep.subr.mxu0 0.0
    %441 = vmatpush1.msra.mxu0 %v352
    %442 = vmatprep.subr.mxu0 0.0
    %443 = vmatpush1.msra.mxu0 %v353
    %444 = vmatprep.subr.mxu0 0.0
    %445 = vmatpush1.msra.mxu0 %v354
    %446 = vmatprep.subr.mxu0 0.0
    %447 = vmatpush1.msra.mxu0 %v355
    %448 = vmatprep.subr.mxu0 0.0
    %449 = vmatpush1.msra.mxu0 0.0
    %450 = vmatprep.subr.mxu0 0.0
    %451 = vmatpush1.msra.mxu0 0.0
    %452 = vmatprep.subr.mxu0 0.0
    %453 = vmatpush1.msra.mxu0 0.0
    %454 = vmatprep.subr.mxu0 0.0
    %455 = vmatpush1.msra.mxu0 0.0
    %456 = vmatprep.subr.mxu0 0.0
    %457 = vmatpush1.msra.mxu0 0.0
    %458 = vmatprep.subr.mxu0 0.0
    %459 = vmatpush1.msra.mxu0 0.0
    %460 = vmatprep.subr.mxu0 0.0
    %461 = vmatpush1.msra.mxu0 0.0
    %462 = vmatprep.subr.mxu0 0.0
    %463 = vmatpush1.msra.mxu0 0.0
    %464 = vmatprep.subr.mxu0 0.0
    %465 = vmatpush1.msra.mxu0 0.0
    %466 = vmatprep.subr.mxu0 0.0
    %467 = vmatpush1.msra.mxu0 0.0
    %468 = vmatprep.subr.mxu0 0.0
    %469 = vmatpush1.msra.mxu0 0.0
    %470 = vmatprep.subr.mxu0 0.0
    %471 = vmatpush1.msra.mxu0 0.0
    %472 = vmatprep.subr.mxu0 0.0
    %473 = vmatpush1.msra.mxu0 0.0
    %474 = vmatprep.subr.mxu0 0.0
    %475 = vmatpush1.msra.mxu0 0.0
    %476 = vmatprep.subr.mxu0 0.0
    %477 = vmatpush1.msra.mxu0 0.0
    %478 = vmatprep.subr.mxu0 0.0
    %479 = vmatpush1.msra.mxu0 0.0
    %480 = vmatprep.subr.mxu0 0.0
    %481 = vmatpush1.msra.mxu0 0.0
    %482 = vmatprep.subr.mxu0 0.0
    %483 = vmatpush1.msra.mxu0 0.0
    %484 = vmatprep.subr.mxu0 0.0
    %485 = vmatpush1.msra.mxu0 0.0
    %486 = vmatprep.subr.mxu0 0.0
    %487 = vmatpush1.msra.mxu0 0.0
    %488 = vmatprep.subr.mxu0 0.0
    %489 = vmatpush1.msra.mxu0 0.0
    %490 = vmatprep.subr.mxu0 0.0
    %491 = vmatpush1.msra.mxu0 0.0
    %492 = vmatprep.subr.mxu0 0.0
    %493 = vmatpush1.msra.mxu0 0.0
    %494 = vmatprep.subr.mxu0 0.0
    %495 = vmatpush1.msra.mxu0 0.0
    %496 = vmatprep.subr.mxu0 0.0
    %497 = vmatpush1.msra.mxu0 0.0
    %498 = vmatprep.subr.mxu0 0.0
    %499 = vmatpush1.msra.mxu0 0.0
    %500 = vmatprep.subr.mxu0 0.0
    %501 = vmatpush1.msra.mxu0 0.0
    %502 = vmatprep.subr.mxu0 0.0
    %503 = vmatpush1.msra.mxu0 0.0
    %504 = vmatprep.mubr.f32.mxu0 0.0
    %505 = vmatmul.mubr.f32.gmra.mrb[0].mxu0 %v438
    %v506 = vpop.f32.mrb[0].mxu0
    %v507 = vadd.f32 %v436, %v506
    %v508 = vpop.f32.mrb[0].mxu0
    %509 = vdwg.mxu0
    %v510 = vadd.f32 %v430, %v507
    %v511 = vxor.u32 %v510, 2147483648
    %v512 = vmul.f32 %v511, 1.442695
    %v513 = vpow.pop %v512
    %v514 = vadd.f32 %v513, 1.0
    %v515 = vrcp.pop %v514
    %v516 = vmul.f32 1.0, %v515
    %518 = vrot.lane.b32.xlu0 %v507, 64
    %v519 = vpop.permute.xlu0 %518
    %v521 = vmul.f32 %v516, %v519
    %523 = vrot.lane.b32.xlu0 %v521, 64
    %v524 = vpop.permute.xlu0 %523
    %v526 = vadd.f32 %v430, %v524
    %v527 = vtanh.pop %v526
    %v528 = vsub.f32 1.0, %v516
    %530 = vrot.lane.b32.xlu0 %v527, 96
    %v531 = vpop.permute.xlu0 %530
    %v533 = vmul.f32 %v528, %v531
    %534 = vrot.lane.b32.xlu0 %v344, 32
    %v535 = vpop.permute.xlu0 %534
    %v537 = vmul.f32 %v516, %v535
    %v538 = vadd.f32 %v533, %v537
    %540 = vrot.lane.b32.xlu0 %v538, 96
    %v541 = vpop.permute.xlu0 %540
    %543 = vst.msk [vmem:[%s343] sm:$0xff] %vm158, %v541
    %v544 = vld [vmem:[%s4] sm:$0xff]
    %v545 = vld [vmem:[%s4 + $0x8] sm:$0xff]
    %v546 = vld [vmem:[%s4 + $0x10] sm:$0xff]
    %v547 = vld [vmem:[%s4 + $0x18] sm:$0xff]
    %v548 = vld [vmem:[%s4 + $0x20] sm:$0x1]
    %v549 = vlaneseq
    %v550 = vshrl.u32 %v549, 7
    %v551 = vsub.s32 0, %v550
    %v552 = vrot.slane %v548, %v551
    %v553 = vsel %vm158, %v541, 0
    %555 = vmatprep.subr.mxu0 0.0
    %556 = vmatpush1.msra.mxu0 %v544
    %557 = vmatprep.subr.mxu0 0.0
    %558 = vmatpush1.msra.mxu0 %v545
    %559 = vmatprep.subr.mxu0 0.0
    %560 = vmatpush1.msra.mxu0 %v546
    %561 = vmatprep.subr.mxu0 0.0
    %562 = vmatpush1.msra.mxu0 %v547
    %563 = vmatprep.subr.mxu0 0.0
    %564 = vmatpush1.msra.mxu0 0.0
    %565 = vmatprep.subr.mxu0 0.0
    %566 = vmatpush1.msra.mxu0 0.0
    %567 = vmatprep.subr.mxu0 0.0
    %568 = vmatpush1.msra.mxu0 0.0
    %569 = vmatprep.subr.mxu0 0.0
    %570 = vmatpush1.msra.mxu0 0.0
    %571 = vmatprep.subr.mxu0 0.0
    %572 = vmatpush1.msra.mxu0 0.0
    %573 = vmatprep.subr.mxu0 0.0
    %574 = vmatpush1.msra.mxu0 0.0
    %575 = vmatprep.subr.mxu0 0.0
    %576 = vmatpush1.msra.mxu0 0.0
    %577 = vmatprep.subr.mxu0 0.0
    %578 = vmatpush1.msra.mxu0 0.0
    %579 = vmatprep.subr.mxu0 0.0
    %580 = vmatpush1.msra.mxu0 0.0
    %581 = vmatprep.subr.mxu0 0.0
    %582 = vmatpush1.msra.mxu0 0.0
    %583 = vmatprep.subr.mxu0 0.0
    %584 = vmatpush1.msra.mxu0 0.0
    %585 = vmatprep.subr.mxu0 0.0
    %586 = vmatpush1.msra.mxu0 0.0
    %587 = vmatprep.subr.mxu0 0.0
    %588 = vmatpush1.msra.mxu0 0.0
    %589 = vmatprep.subr.mxu0 0.0
    %590 = vmatpush1.msra.mxu0 0.0
    %591 = vmatprep.subr.mxu0 0.0
    %592 = vmatpush1.msra.mxu0 0.0
    %593 = vmatprep.subr.mxu0 0.0
    %594 = vmatpush1.msra.mxu0 0.0
    %595 = vmatprep.subr.mxu0 0.0
    %596 = vmatpush1.msra.mxu0 0.0
    %597 = vmatprep.subr.mxu0 0.0
    %598 = vmatpush1.msra.mxu0 0.0
    %599 = vmatprep.subr.mxu0 0.0
    %600 = vmatpush1.msra.mxu0 0.0
    %601 = vmatprep.subr.mxu0 0.0
    %602 = vmatpush1.msra.mxu0 0.0
    %603 = vmatprep.subr.mxu0 0.0
    %604 = vmatpush1.msra.mxu0 0.0
    %605 = vmatprep.subr.mxu0 0.0
    %606 = vmatpush1.msra.mxu0 0.0
    %607 = vmatprep.subr.mxu0 0.0
    %608 = vmatpush1.msra.mxu0 0.0
    %609 = vmatprep.subr.mxu0 0.0
    %610 = vmatpush1.msra.mxu0 0.0
    %611 = vmatprep.subr.mxu0 0.0
    %612 = vmatpush1.msra.mxu0 0.0
    %613 = vmatprep.subr.mxu0 0.0
    %614 = vmatpush1.msra.mxu0 0.0
    %615 = vmatprep.subr.mxu0 0.0
    %616 = vmatpush1.msra.mxu0 0.0
    %617 = vmatprep.subr.mxu0 0.0
    %618 = vmatpush1.msra.mxu0 0.0
    %619 = vmatprep.mubr.f32.mxu0 0.0
    %620 = vmatmul.mubr.f32.gmra.mrb[0].mxu0 %v553
    %v621 = vpop.f32.mrb[0].mxu0
    %v622 = vadd.f32 %v552, %v621
    %v623 = vpop.f32.mrb[0].mxu0
    %624 = vdwg.mxu0
    %625 = vmax.xlane.f32.xlu0 %v622
    %v626 = vpop.xlane.xlu0 %625
    %v627 = vsub.f32 %v622, %v626
    %v628 = vmul.f32 %v627, 1.442695
    %v629 = vpow.pop %v628
    %630 = vadd.xlane.f32.xlu0 %v629
    %v631 = vpop.xlane.xlu0 %630
    %v632 = vlog2.pop %v631
    %v633 = vmul.f32 %v632, 0.6931472
    %v634 = vsub.f32 %v627, %v633
    %635 = vst [vmem:[#allocation5] sm:$0xff] %v634
    // Predicated region
    $region30: #{tpu_custom_call.1} parent=1 // pred_check
      _
    $region31: #{tpu_custom_call.1} parent=1 // pred_check_branch
      %637 = sbr.rel (0) target = $region33
    $region32: #{tpu_custom_call.1} parent=1 // pred_region
      %s639 = ssub.s32 128, 128
      %640 = vsyncadd [#allocation4], %s639
      %s642 = sshll.u32 [#allocation5], 4
      %s643 = int_to_ptr.vmem [resolvable:$true] %s642
      %645 = dma.vmem_to_hbm [thread:$0]  %s643, 128, %s5, [#allocation4]
    $region33: #{tpu_custom_call.1} parent=1 // pred_fallthru
      _
    // Predicated region
    $region34: #{tpu_custom_call.1} parent=1 // pred_check
      _
    $region35: #{tpu_custom_call.1} parent=1 // pred_check_branch
      %647 = sbr.rel (0) target = $region37
    $region36: #{tpu_custom_call.1} parent=1 // pred_region
      %s649 = ssub.s32 256, 256
      %650 = vsyncadd [#allocation7], %s649
      %s651 = sshll.u32 [#allocation6], 4
      %s652 = int_to_ptr.vmem [resolvable:$true] %s651
      %657 = dma.vmem_to_hbm [thread:$0]  %s652, 256, %s6, [#allocation7], 128, 128, 8
    $region37: #{tpu_custom_call.1} parent=1 // pred_fallthru
      _
    // Predicated region
    $region38: #{tpu_custom_call.1} parent=1 // pred_check
      _
    $region39: #{tpu_custom_call.1} parent=1 // pred_check_branch
      %659 = sbr.rel (0) target = $region41
    $region40: #{tpu_custom_call.1} parent=1 // pred_region
      %660 = dma.done [#allocation4], 128
    $region41: #{tpu_custom_call.1} parent=1 // pred_fallthru
      _
    // Predicated region
    $region42: #{tpu_custom_call.1} parent=1 // pred_check
      _
    $region43: #{tpu_custom_call.1} parent=1 // pred_check_branch
      %662 = sbr.rel (0) target = $region45
    $region44: #{tpu_custom_call.1} parent=1 // pred_region
      %663 = dma.done [#allocation7], 256
    $region45: #{tpu_custom_call.1} parent=1 // pred_fallthru
      _
    %664 = vsyncpa [#allocation3], 1
    %665 = vsyncpa [#allocation4], 1
    %666 = vsyncpa [#allocation7], 1

</llo_original>
